<compile_context>
chip_gen: v5e
topology: v5e:2x2
jax: 0.10.0
libtpu: 0.0.40
codegen_flags: <defaults>
</compile_context>

<pallas_src>
import math

import jax
import jax.numpy as jnp
from jax.experimental import pallas as pl
from jax.experimental.pallas import tpu as pltpu

NUM_HIDDENS = 256
VOCAB_SIZE = 29
MAX_POS = 12


def _round_up(x: int, m: int) -> int:
    return (x + m - 1) // m * m


def ebd_kernel(ids_ref, pos_ids_ref, word_ref, pos_ref, o_ref):
    # ids_ref:     (TILE_M, 1)  int32   token ids
    # pos_ids_ref: (TILE_M, 1)  int32   position ids (flat_idx % seq_len)
    # word_ref:    (VOCAB_PAD, 256) f32 word embedding table (zero-padded)
    # pos_ref:     (POS_PAD,   256) f32 positional embedding table (zero-padded)
    # o_ref:       (TILE_M, 256)
    tile_m = o_ref.shape[0]
    vocab_pad = word_ref.shape[0]
    npos_pad = pos_ref.shape[0]

    ids = ids_ref[...]       # (TILE_M, 1)
    pids = pos_ids_ref[...]  # (TILE_M, 1)

    # Word-embedding gather as one-hot @ table (MXU).
    w_iota = jax.lax.broadcasted_iota(jnp.int32, (tile_m, vocab_pad), 1)
    w_onehot = (w_iota == ids).astype(jnp.float32)
    word_vec = jnp.dot(w_onehot, word_ref[...],
                       preferred_element_type=jnp.float32)

    # Positional-embedding gather as one-hot @ table (MXU).
    p_iota = jax.lax.broadcasted_iota(jnp.int32, (tile_m, npos_pad), 1)
    p_onehot = (p_iota == pids).astype(jnp.float32)
    pos_vec = jnp.dot(p_onehot, pos_ref[...],
                      preferred_element_type=jnp.float32)

    o_ref[...] = (word_vec + pos_vec).astype(o_ref.dtype)


def ebd_forward(X, word_table, pos_table, *, tile_m=512):
    """X: integer tokens (..., seq) with values in [0, VOCAB_SIZE);
    word_table: (29, 256); pos_table: (12, 256). Returns (..., seq, 256)."""
    X = X.astype(jnp.int32)
    seq = X.shape[-1]
    assert seq <= MAX_POS, "sequence length exceeds positional table"

    m = math.prod(X.shape)
    ids = X.reshape(m, 1)
    pos_ids = jnp.broadcast_to(
        jnp.arange(seq, dtype=jnp.int32), X.shape).reshape(m, 1)

    # Pad tables to sublane-friendly row counts (zero rows are never selected).
    vocab_pad = _round_up(VOCAB_SIZE, 8)
    npos_pad = _round_up(MAX_POS, 8)
    word_p = jnp.pad(word_table, ((0, vocab_pad - VOCAB_SIZE), (0, 0)))
    pos_p = jnp.pad(pos_table, ((0, npos_pad - MAX_POS), (0, 0)))

    # Tile the token axis; pad M to a multiple of the tile (padded token rows
    # use id/pos 0 and are sliced off afterwards).
    tile = min(tile_m, _round_up(m, 8))
    m_pad = _round_up(m, tile)
    if m_pad != m:
        ids = jnp.pad(ids, ((0, m_pad - m), (0, 0)))
        pos_ids = jnp.pad(pos_ids, ((0, m_pad - m), (0, 0)))

    out = pl.pallas_call(
        ebd_kernel,
        out_shape=jax.ShapeDtypeStruct((m_pad, NUM_HIDDENS), word_table.dtype),
        grid_spec=pltpu.PrefetchScalarGridSpec(
            num_scalar_prefetch=0,
            grid=(m_pad // tile,),
            in_specs=[
                pl.BlockSpec((tile, 1), lambda i: (i, 0)),
                pl.BlockSpec((tile, 1), lambda i: (i, 0)),
                # tables: constant index_map -> VMEM-resident across the grid
                pl.BlockSpec((vocab_pad, NUM_HIDDENS), lambda i: (0, 0)),
                pl.BlockSpec((npos_pad, NUM_HIDDENS), lambda i: (0, 0)),
            ],
            out_specs=pl.BlockSpec((tile, NUM_HIDDENS), lambda i: (i, 0)),
        ),
        compiler_params=pltpu.CompilerParams(
            dimension_semantics=("parallel",),
        ),
    )(ids, pos_ids, word_p, pos_p)

    return out[:m].reshape(X.shape + (NUM_HIDDENS,))


def reference(X, word_table, pos_table):
    seq = X.shape[-1]
    return word_table[X] + pos_table[jnp.arange(seq)][None, :, :]


if __name__ == "__main__":
    key = jax.random.PRNGKey(0)
    kx, kw, kp = jax.random.split(key, 3)

    batch, seq = 2, 8
    X = jax.random.randint(kx, (batch, seq), 0, VOCAB_SIZE, dtype=jnp.int32)
    word_table = jax.random.normal(kw, (VOCAB_SIZE, NUM_HIDDENS), jnp.float32)
    pos_table = jax.random.normal(kp, (MAX_POS, NUM_HIDDENS), jnp.float32)

    out = jax.block_until_ready(ebd_forward(X, word_table, pos_table))
    ref = jax.block_until_ready(reference(X, word_table, pos_table))

    assert out.shape == (batch, seq, NUM_HIDDENS)
    assert jnp.allclose(out, ref, atol=1e-5, rtol=1e-5)
    print("KERNEL_OK")
</pallas_src>

<mosaic_0001>
module attributes {stable_mosaic.version = 11 : i64} {
  func.func @ebd_kernel(%arg0: i32, %arg1: memref<16x1xi32, #tpu.memory_space<vmem>>, %arg2: memref<16x1xi32, #tpu.memory_space<vmem>>, %arg3: memref<32x256xf32, #tpu.memory_space<vmem>>, %arg4: memref<16x256xf32, #tpu.memory_space<vmem>>, %arg5: memref<16x256xf32, #tpu.memory_space<vmem>>) attributes {dimension_semantics = [#tpu.dimension_semantics<parallel>], iteration_bounds = array<i64: 1>, scalar_prefetch = 0 : i64, scratch_operands = 0 : i64, tpu.core_type = #tpu.core_type<tc>, window_params = [{transform_indices = @transform_0, window_bounds = array<i64: 16, 1>}, {transform_indices = @transform_1, window_bounds = array<i64: 16, 1>}, {pipeline_mode = #tpu.pipeline_mode<synchronous>, transform_indices = @transform_2, window_bounds = array<i64: 32, 256>}, {pipeline_mode = #tpu.pipeline_mode<synchronous>, transform_indices = @transform_3, window_bounds = array<i64: 16, 256>}, {transform_indices = @transform_4, window_bounds = array<i64: 16, 256>}]} {
    %c0 = arith.constant 0 : index
    %c0_0 = arith.constant 0 : index
    %0 = vector.load %arg1[%c0, %c0_0] : memref<16x1xi32, #tpu.memory_space<vmem>>, vector<16x1xi32>
    %c0_1 = arith.constant 0 : index
    %c0_2 = arith.constant 0 : index
    %1 = vector.load %arg2[%c0_1, %c0_2] : memref<16x1xi32, #tpu.memory_space<vmem>>, vector<16x1xi32>
    %2 = tpu.iota {dimensions = array<i32: 1>} : vector<16x32xi32>
    %3 = vector.broadcast %0 : vector<16x1xi32> to vector<16x32xi32>
    %4 = arith.cmpi eq, %2, %3 : vector<16x32xi32>
    %5 = arith.extui %4 : vector<16x32xi1> to vector<16x32xi32>
    %6 = arith.sitofp %5 : vector<16x32xi32> to vector<16x32xf32>
    %c0_3 = arith.constant 0 : index
    %c0_4 = arith.constant 0 : index
    %7 = vector.load %arg3[%c0_3, %c0_4] : memref<32x256xf32, #tpu.memory_space<vmem>>, vector<32x256xf32>
    %cst = arith.constant dense<0.000000e+00> : vector<16x256xf32>
    %8 = tpu.matmul %6, %7, %cst {dimension_numbers = #tpu.dot_dimension_numbers<[1], [0], [0], [1], [0, 0, 1, 1], [], []>} : vector<16x32xf32>, vector<32x256xf32>, vector<16x256xf32> -> vector<16x256xf32>
    %9 = tpu.iota {dimensions = array<i32: 1>} : vector<16x16xi32>
    %10 = vector.broadcast %1 : vector<16x1xi32> to vector<16x16xi32>
    %11 = arith.cmpi eq, %9, %10 : vector<16x16xi32>
    %12 = arith.extui %11 : vector<16x16xi1> to vector<16x16xi32>
    %13 = arith.sitofp %12 : vector<16x16xi32> to vector<16x16xf32>
    %c0_5 = arith.constant 0 : index
    %c0_6 = arith.constant 0 : index
    %14 = vector.load %arg4[%c0_5, %c0_6] : memref<16x256xf32, #tpu.memory_space<vmem>>, vector<16x256xf32>
    %cst_7 = arith.constant dense<0.000000e+00> : vector<16x256xf32>
    %15 = tpu.matmul %13, %14, %cst_7 {dimension_numbers = #tpu.dot_dimension_numbers<[1], [0], [0], [1], [0, 0, 1, 1], [], []>} : vector<16x16xf32>, vector<16x256xf32>, vector<16x256xf32> -> vector<16x256xf32>
    %16 = arith.addf %8, %15 : vector<16x256xf32>
    %c0_8 = arith.constant 0 : index
    %c0_9 = arith.constant 0 : index
    %17 = vector.load %arg5[%c0_8, %c0_9] : memref<16x256xf32, #tpu.memory_space<vmem>>, vector<16x256xf32>
    tpu.vector_store %arg5[%c0_8, %c0_9], %16 {strides = array<i32>} : memref<16x256xf32, #tpu.memory_space<vmem>>, vector<16x256xf32>,
    return
  }
  func.func @transform_0(%arg0: i32) -> (i32, i32) {
    %c0_i32 = arith.constant 0 : i32
    %c0_i32_0 = arith.constant 0 : i32
    return %arg0, %c0_i32 : i32, i32
  }
  func.func @transform_1(%arg0: i32) -> (i32, i32) {
    %c0_i32 = arith.constant 0 : i32
    %c0_i32_0 = arith.constant 0 : i32
    return %arg0, %c0_i32 : i32, i32
  }
  func.func @transform_2(%arg0: i32) -> (i32, i32) {
    %c0_i32 = arith.constant 0 : i32
    %c0_i32_0 = arith.constant 0 : i32
    %c0_i32_1 = arith.constant 0 : i32
    return %c0_i32, %c0_i32_0 : i32, i32
  }
  func.func @transform_3(%arg0: i32) -> (i32, i32) {
    %c0_i32 = arith.constant 0 : i32
    %c0_i32_0 = arith.constant 0 : i32
    %c0_i32_1 = arith.constant 0 : i32
    return %c0_i32, %c0_i32_0 : i32, i32
  }
  func.func @transform_4(%arg0: i32) -> (i32, i32) {
    %c0_i32 = arith.constant 0 : i32
    %c0_i32_0 = arith.constant 0 : i32
    return %arg0, %c0_i32 : i32, i32
  }
}

</mosaic_0001>

<llo_original>
// kernel: tpu_custom_call.1
$region0: #{tpu_custom_call.1}
  #allocation0 [shape = 'u32[]', space=smem, size = 0x4, offset = 0x4, fixed_abs, tag = 'smem constant byte address 0x4 - core index']
  #allocation1 [shape = 'u32[72,128]{1,0:T(1,128)}', space=vmem, size = 0x9000, scoped, tag = 'internal scratch']
  %s0 = inlined_call_operand.vmem [shape: s32[16,1], index: 0, kind: input, shape index: {}]
  %s1 = inlined_call_operand.vmem [shape: s32[16,1], index: 1, kind: input, shape index: {}]
  %s2 = inlined_call_operand.hbm [shape: f32[32,256], index: 2, kind: input, shape index: {}]
  %s3 = inlined_call_operand.vmem [shape: f32[16,256], index: 3, kind: input, shape index: {}]
  %s4 = inlined_call_operand.hbm [shape: f32[16,256], index: 4, kind: output, shape index: {}]
  %s5 = sld [smem:[#allocation0]]
  $region30: #{tpu_custom_call.1} parent=0
    _
  %s7 = ssub.s32 1, %s5
  %s8 = scalar_select 0, %s7, %s5
  $region1: #{tpu_custom_call.1} parent=0
    #allocation2 [shape = 'u8[32768]{0}', space=vmem, size = 0x8000, scoped, tag = 'input window, operand 2, single buffered']
    #allocation3 [shape = 's32[1]{0}', space=sflag, size = 0x4, scoped, tag = 'scoped memory for tpu_custom_call.1']
    #allocation4 [shape = 's32[1]{0}', space=sflag, size = 0x4, scoped, tag = 'scoped memory for tpu_custom_call.1']
    #allocation5 [shape = 'u8[16384]{0}', space=vmem, size = 0x4000, scoped, tag = 'output window, operand 0, single buffered']
    %9 = vsyncpa [#allocation3], 0
    %10 = vsyncpa [#allocation4], 0
    // Predicated region
    $region2: #{tpu_custom_call.1} parent=1 // pred_check
      _
    $region3: #{tpu_custom_call.1} parent=1 // pred_check_branch
      %12 = sbr.rel (0) target = $region5
    $region4: #{tpu_custom_call.1} parent=1 // pred_region
      _
    $region5: #{tpu_custom_call.1} parent=1 // pred_fallthru
      _
    // Predicated region
    $region6: #{tpu_custom_call.1} parent=1 // pred_check
      _
    $region7: #{tpu_custom_call.1} parent=1 // pred_check_branch
      %14 = sbr.rel (0) target = $region9
    $region8: #{tpu_custom_call.1} parent=1 // pred_region
      _
    $region9: #{tpu_custom_call.1} parent=1 // pred_fallthru
      _
    // Predicated region
    $region10: #{tpu_custom_call.1} parent=1 // pred_check
      _
    $region11: #{tpu_custom_call.1} parent=1 // pred_check_branch
      %16 = sbr.rel (0) target = $region13
    $region12: #{tpu_custom_call.1} parent=1 // pred_region
      %18 = vsyncadd [#allocation3], 0
      %s19 = sshll.u32 %s2, 4
      %s20 = int_to_ptr.hbm [resolvable:$true] %s19
      %s21 = sshll.u32 [#allocation2], 4
      %s22 = int_to_ptr.vmem [resolvable:$true] %s21
      %27 = dma.hbm_to_vmem [thread:$0]  %s20, 1024, %s22, [#allocation3], 256, 256, 16
    $region13: #{tpu_custom_call.1} parent=1 // pred_fallthru
      _
    // Predicated region
    $region14: #{tpu_custom_call.1} parent=1 // pred_check
      _
    $region15: #{tpu_custom_call.1} parent=1 // pred_check_branch
      %29 = sbr.rel (0) target = $region17
    $region16: #{tpu_custom_call.1} parent=1 // pred_region
      _
    $region17: #{tpu_custom_call.1} parent=1 // pred_fallthru
      _
    // Predicated region
    $region18: #{tpu_custom_call.1} parent=1 // pred_check
      _
    $region19: #{tpu_custom_call.1} parent=1 // pred_check_branch
      %31 = sbr.rel (0) target = $region21
    $region20: #{tpu_custom_call.1} parent=1 // pred_region
      %33 = dma.done [#allocation3], 1024
    $region21: #{tpu_custom_call.1} parent=1 // pred_fallthru
      _
    %v34 = vld [vmem:[%s0] sm:$0xff]
    %v35 = vld [vmem:[%s0 + $0x8] sm:$0xff]
    %v36 = vld [vmem:[%s1] sm:$0xff]
    %v37 = vld [vmem:[%s1 + $0x8] sm:$0xff]
    %v38 = vlaneseq
    %v39 = vand.u32 %v38, 127
    %40 = vset.pattern.permute.xlu0 0
    %41 = vperm.xlu0 %40, %v34
    %v42 = vpop.permute.xlu0 %41
    %43 = vset.pattern.permute.xlu0 0
    %44 = vperm.xlu0 %43, %v35
    %v45 = vpop.permute.xlu0 %44
    %vm46 = vcmp.eq.s32.totalorder %v39, %v42
    %vm47 = vcmp.eq.s32.totalorder %v39, %v45
    %v48 = vsel %vm46, 1, 0
    %v49 = vsel %vm47, 1, 0
    %v50 = vcvt.s32.f32 %v48
    %v51 = vcvt.s32.f32 %v49
    %v52 = vld [vmem:[#allocation2] sm:$0xff]
    %v53 = vld [vmem:[#allocation2 + $0x8] sm:$0xff]
    %v54 = vld [vmem:[#allocation2 + $0x10] sm:$0xff]
    %v55 = vld [vmem:[#allocation2 + $0x18] sm:$0xff]
    %v56 = vld [vmem:[#allocation2 + $0x20] sm:$0xff]
    %v57 = vld [vmem:[#allocation2 + $0x28] sm:$0xff]
    %v58 = vld [vmem:[#allocation2 + $0x30] sm:$0xff]
    %v59 = vld [vmem:[#allocation2 + $0x38] sm:$0xff]
    %60 = vset.pattern.permute.xlu0 0
    %61 = vperm.xlu0 %60, %v36
    %v62 = vpop.permute.xlu0 %61
    %63 = vset.pattern.permute.xlu0 0
    %64 = vperm.xlu0 %63, %v37
    %v65 = vpop.permute.xlu0 %64
    %vm66 = vcmp.eq.s32.totalorder %v39, %v62
    %vm67 = vcmp.eq.s32.totalorder %v39, %v65
    %v68 = vsel %vm66, 1, 0
    %v69 = vsel %vm67, 1, 0
    %v70 = vcvt.s32.f32 %v68
    %v71 = vcvt.s32.f32 %v69
    %v72 = vld [vmem:[%s3] sm:$0xff]
    %v73 = vld [vmem:[%s3 + $0x8] sm:$0xff]
    %v74 = vld [vmem:[%s3 + $0x10] sm:$0xff]
    %v75 = vld [vmem:[%s3 + $0x18] sm:$0xff]
    %vm76 = vcmask 130048
    %v78 = vsel %vm76, %v70, 0
    %v81 = vsel %vm76, %v71, 0
    %83 = vmatpush.msra.mxu0 0.0
    %84 = vmatpush.msra.mxu0 0.0
    %85 = vmatpush.msra.mxu0 0.0
    %86 = vmatpush.msra.mxu0 0.0
    %87 = vmatpush.msra.mxu0 0.0
    %88 = vmatpush.msra.mxu0 0.0
    %89 = vmatpush.msra.mxu0 0.0
    %90 = vmatpush.msra.mxu0 0.0
    %91 = vmatpush.msra.mxu0 0.0
    %92 = vmatpush.msra.mxu0 0.0
    %93 = vmatpush.msra.mxu0 0.0
    %94 = vmatpush.msra.mxu0 0.0
    %95 = vmatpush.msra.mxu0 0.0
    %96 = vmatpush.msra.mxu0 0.0
    %97 = vmatpush.msra.mxu0 %v74
    %98 = vmatpush.msra.mxu0 %v72
    %99 = vmatmul.f32.gmra.mxu0 %v78
    %v100 = vpop.f32.mrf.mxu0
    %v101 = vadd.f32 0.0, %v100
    %102 = vmatmul.f32.gmra.mxu0 %v81
    %v103 = vpop.f32.mrf.mxu0
    %v104 = vadd.f32 0.0, %v103
    %105 = vdwg.mxu0
    %106 = vmatpush.msra.mxu0 0.0
    %107 = vmatpush.msra.mxu0 0.0
    %108 = vmatpush.msra.mxu0 0.0
    %109 = vmatpush.msra.mxu0 0.0
    %110 = vmatpush.msra.mxu0 0.0
    %111 = vmatpush.msra.mxu0 0.0
    %112 = vmatpush.msra.mxu0 0.0
    %113 = vmatpush.msra.mxu0 0.0
    %114 = vmatpush.msra.mxu0 0.0
    %115 = vmatpush.msra.mxu0 0.0
    %116 = vmatpush.msra.mxu0 0.0
    %117 = vmatpush.msra.mxu0 0.0
    %118 = vmatpush.msra.mxu0 0.0
    %119 = vmatpush.msra.mxu0 0.0
    %120 = vmatpush.msra.mxu0 %v75
    %121 = vmatpush.msra.mxu0 %v73
    %122 = vmatmul.f32.gmra.mxu0 %v78
    %v123 = vpop.f32.mrf.mxu0
    %v124 = vadd.f32 0.0, %v123
    %125 = vmatmul.f32.gmra.mxu0 %v81
    %v126 = vpop.f32.mrf.mxu0
    %v127 = vadd.f32 0.0, %v126
    %128 = vdwg.mxu0
    %vm129 = vcmask 261120
    %v131 = vsel %vm129, %v50, 0
    %v134 = vsel %vm129, %v51, 0
    %136 = vmatpush.msra.mxu0 0.0
    %137 = vmatpush.msra.mxu0 0.0
    %138 = vmatpush.msra.mxu0 0.0
    %139 = vmatpush.msra.mxu0 0.0
    %140 = vmatpush.msra.mxu0 0.0
    %141 = vmatpush.msra.mxu0 0.0
    %142 = vmatpush.msra.mxu0 0.0
    %143 = vmatpush.msra.mxu0 0.0
    %144 = vmatpush.msra.mxu0 0.0
    %145 = vmatpush.msra.mxu0 0.0
    %146 = vmatpush.msra.mxu0 0.0
    %147 = vmatpush.msra.mxu0 0.0
    %148 = vmatpush.msra.mxu0 %v58
    %149 = vmatpush.msra.mxu0 %v56
    %150 = vmatpush.msra.mxu0 %v54
    %151 = vmatpush.msra.mxu0 %v52
    %152 = vmatmul.f32.gmra.mxu0 %v131
    %v153 = vpop.f32.mrf.mxu0
    %v154 = vadd.f32 %v101, %v153
    %155 = vmatmul.f32.gmra.mxu0 %v134
    %v156 = vpop.f32.mrf.mxu0
    %v157 = vadd.f32 %v104, %v156
    %158 = vdwg.mxu0
    %159 = vmatpush.msra.mxu0 0.0
    %160 = vmatpush.msra.mxu0 0.0
    %161 = vmatpush.msra.mxu0 0.0
    %162 = vmatpush.msra.mxu0 0.0
    %163 = vmatpush.msra.mxu0 0.0
    %164 = vmatpush.msra.mxu0 0.0
    %165 = vmatpush.msra.mxu0 0.0
    %166 = vmatpush.msra.mxu0 0.0
    %167 = vmatpush.msra.mxu0 0.0
    %168 = vmatpush.msra.mxu0 0.0
    %169 = vmatpush.msra.mxu0 0.0
    %170 = vmatpush.msra.mxu0 0.0
    %171 = vmatpush.msra.mxu0 %v59
    %172 = vmatpush.msra.mxu0 %v57
    %173 = vmatpush.msra.mxu0 %v55
    %174 = vmatpush.msra.mxu0 %v53
    %175 = vmatmul.f32.gmra.mxu0 %v131
    %v176 = vpop.f32.mrf.mxu0
    %v177 = vadd.f32 %v124, %v176
    %178 = vmatmul.f32.gmra.mxu0 %v134
    %v179 = vpop.f32.mrf.mxu0
    %v180 = vadd.f32 %v127, %v179
    %181 = vdwg.mxu0
    %182 = vst [vmem:[#allocation5] sm:$0xff] %v154
    %183 = vst [vmem:[#allocation5 + $0x8] sm:$0xff] %v177
    %184 = vst [vmem:[#allocation5 + $0x10] sm:$0xff] %v157
    %185 = vst [vmem:[#allocation5 + $0x18] sm:$0xff] %v180
    // Predicated region
    $region22: #{tpu_custom_call.1} parent=1 // pred_check
      _
    $region23: #{tpu_custom_call.1} parent=1 // pred_check_branch
      %187 = sbr.rel (0) target = $region25
    $region24: #{tpu_custom_call.1} parent=1 // pred_region
      %189 = vsyncadd [#allocation4], 0
      %s190 = sshll.u32 [#allocation5], 4
      %s191 = int_to_ptr.vmem [resolvable:$true] %s190
      %s192 = sshll.u32 %s4, 4
      %s193 = int_to_ptr.hbm [resolvable:$true] %s192
      %198 = dma.vmem_to_hbm [thread:$0]  %s191, 512, %s193, [#allocation4], 256, 256, 16
    $region25: #{tpu_custom_call.1} parent=1 // pred_fallthru
      _
    // Predicated region
    $region26: #{tpu_custom_call.1} parent=1 // pred_check
      _
    $region27: #{tpu_custom_call.1} parent=1 // pred_check_branch
      %200 = sbr.rel (0) target = $region29
    $region28: #{tpu_custom_call.1} parent=1 // pred_region
      %202 = dma.done [#allocation4], 512
    $region29: #{tpu_custom_call.1} parent=1 // pred_fallthru
      _
    %203 = vsyncpa [#allocation3], 1
    %204 = vsyncpa [#allocation4], 1

</llo_original>
